<compile_context>
chip_gen: v7x
topology: tpu7x:2x2x1
jax: 0.10.0
libtpu: 0.0.40
codegen_flags: <defaults>
</compile_context>

<pallas_src>
import jax
import jax.numpy as jnp
from jax.experimental import pallas as pl
from jax.experimental.pallas import tpu as pltpu


# ----------------------------------------------------------------------------
# Hardware-aware sizing helpers
# ----------------------------------------------------------------------------
def _vmem_capacity_bytes():
    try:
        return int(pltpu.get_tpu_info().vmem_capacity_bytes)
    except Exception:
        return 64 * 1024 * 1024  # conservative fallback (v7x per-TC VMEM)


def _vmem_limit_bytes():
    # Leave headroom for double-buffered inputs + outputs on 64 MiB (v7x) parts,
    # allow large tiles on 128 MiB (v5e/v6e) parts.
    return min(_vmem_capacity_bytes() // 2, 64 * 1024 * 1024)


# ----------------------------------------------------------------------------
# Fused conv (kernel = (ks, 2E)) + bias + ReLU + global max pool
#   == self.pool(F.relu(self.conv1x(embeddings))).squeeze(2) in TextCNN
# ----------------------------------------------------------------------------
def _conv_relu_gmax_kernel(emb_ref, w_ref, b_ref, o_ref):
    # emb_ref: (TB, L, D)  tile of batch elements (D = 2*embedding_dim)
    # w_ref:   (KS, D, C)  conv weight, tap-major
    # b_ref:   (1, C)      conv bias
    # o_ref:   (TB, 1, C)  max over valid positions of relu(conv)
    tb, L, _ = emb_ref.shape
    ks = w_ref.shape[0]
    C = w_ref.shape[2]
    l_out = L - ks + 1
    bias = b_ref[...]                                    # (1, C)
    for b in range(tb):                                  # static, tb <= 8
        emb = emb_ref[b]                                 # (L, D)
        acc = jnp.zeros((l_out, C), jnp.float32)
        for j in range(ks):                              # static, ks in {3,4,5}
            acc += jnp.dot(emb[j:j + l_out, :], w_ref[j],
                           preferred_element_type=jnp.float32)
        acc = jnp.maximum(acc + bias, 0.0)               # bias + ReLU in VMEM
        o_ref[b] = jnp.max(acc, axis=0, keepdims=True).astype(o_ref.dtype)


def conv_relu_global_max(emb, weight, bias, *, batch_tile=8):
    """emb: (N, L, D); weight: (C, KS, D); bias: (C,)  ->  (N, C).

    Equivalent to pool(relu(Conv2d(1, C, (KS, D))(emb[:, None]))).squeeze(2)
    with the Conv2d weight reshaped (C, 1, KS, D) -> (C, KS, D)."""
    N, L, D = emb.shape
    C, KS, D2 = weight.shape
    assert D2 == D and L >= KS

    w_t = jnp.transpose(weight, (1, 2, 0))               # (KS, D, C) tap-major
    b2 = bias.reshape(1, C)

    tb = max(1, min(batch_tile, N))
    n_pad = -(-N // tb) * tb
    if n_pad != N:
        emb = jnp.pad(emb, ((0, n_pad - N), (0, 0), (0, 0)))  # padded rows sliced off

    out = pl.pallas_call(
        _conv_relu_gmax_kernel,
        out_shape=jax.ShapeDtypeStruct((n_pad, 1, C), emb.dtype),
        grid_spec=pltpu.PrefetchScalarGridSpec(
            num_scalar_prefetch=0,
            grid=(n_pad // tb,),
            in_specs=[pl.BlockSpec((tb, L, D), lambda i: (i, 0, 0)),
                      pl.BlockSpec((KS, D, C), lambda i: (0, 0, 0)),
                      pl.BlockSpec((1, C), lambda i: (0, 0))],
            out_specs=pl.BlockSpec((tb, 1, C), lambda i: (i, 0, 0)),
        ),
        compiler_params=pltpu.CompilerParams(
            dimension_semantics=("parallel",),
            vmem_limit_bytes=_vmem_limit_bytes(),
        ),
    )(emb, w_t, b2)
    return out[:N, 0, :]


# ----------------------------------------------------------------------------
# Standalone GlobalMaxPool1d (module semantics), lane-dense packed version
# ----------------------------------------------------------------------------
def global_max_pool1d(x, *, target_tile_bytes=None, vmem_limit_bytes=None):
    """x: (N, C, L, 1) -> (N, C, 1), matching GlobalMaxPool1d.forward."""
    x3 = jnp.squeeze(x, axis=3)                  # (N, C, L)
    N, C, L = x3.shape
    dtype = x3.dtype
    rows = N * C
    itemsize = jnp.dtype(dtype).itemsize
    neg = (jnp.finfo(dtype).min if jnp.issubdtype(dtype, jnp.floating)
           else jnp.iinfo(dtype).min)

    # Lane-dense packing: pad L to a power of two (dtype-min so maxima are
    # unchanged) and pack P = 128 // L_pad rows per 128-lane row. For L > 128
    # just round L up to a multiple of 128 lanes (P = 1).
    if L <= 128:
        l_pad = 1 if L <= 1 else 1 << (L - 1).bit_length()
        P = 128 // l_pad
    else:
        l_pad = -(-L // 128) * 128
        P = 1
    row_width = P * l_pad                        # multiple of 128 -> dense lanes

    x2 = x3.reshape(rows, L)
    if l_pad != L:
        x2 = jnp.pad(x2, ((0, 0), (0, l_pad - L)), constant_values=neg)

    # VMEM-aware tiling over the *actual* lane-dense footprint.
    sub = max(8, 32 // itemsize)                 # sublane quantum: 8 f32, 16 bf16
    if vmem_limit_bytes is None:
        vmem_limit_bytes = _vmem_limit_bytes()
    if target_tile_bytes is None:
        target_tile_bytes = vmem_limit_bytes // 4    # 2x double-buffered input + out
    bytes_per_packed_row = row_width * itemsize
    tr = max(sub, (target_tile_bytes // bytes_per_packed_row) // sub * sub)
    # TODO(synk): for pathological L where even `sub` packed rows exceed the
    # budget, add a trailing "arbitrary" grid axis over L with a running-max.

    packed_rows = -(-rows // P)
    tr = max(sub, min(tr, -(-packed_rows // sub) * sub))   # don't over-pad tiny inputs
    g = -(-packed_rows // tr)
    packed_rows_padded = g * tr
    rows_padded = packed_rows_padded * P
    if rows_padded != rows:
        # Padded rows are dtype-min everywhere; their outputs are sliced off.
        x2 = jnp.pad(x2, ((0, rows_padded - rows), (0, 0)), constant_values=neg)
    x_packed = x2.reshape(packed_rows_padded, row_width)   # contiguous, lane-dense

    def kernel(x_ref, o_ref):
        xv = x_ref[...]                                     # (tr, row_width) dense load
        cols = [jnp.max(xv[:, p * l_pad:(p + 1) * l_pad], axis=-1, keepdims=True)
                for p in range(P)]
        o_ref[...] = cols[0] if P == 1 else jnp.concatenate(cols, axis=-1)

    out = pl.pallas_call(
        kernel,
        out_shape=jax.ShapeDtypeStruct((packed_rows_padded, P), dtype),
        grid_spec=pltpu.PrefetchScalarGridSpec(
            num_scalar_prefetch=0,
            grid=(g,),
            in_specs=[pl.BlockSpec((tr, row_width), lambda i: (i, 0))],
            out_specs=pl.BlockSpec((tr, P), lambda i: (i, 0)),
        ),
        compiler_params=pltpu.CompilerParams(
            dimension_semantics=("parallel",),
            vmem_limit_bytes=vmem_limit_bytes,
        ),
    )(x_packed)

    return out.reshape(rows_padded)[:rows].reshape(N, C, 1)


# ----------------------------------------------------------------------------
# References + demo (TextCNN-shaped forward)
# ----------------------------------------------------------------------------
def _conv_relu_gmax_ref(emb, weight, bias):
    N, L, D = emb.shape
    C, KS, _ = weight.shape
    Lo = L - KS + 1
    acc = jnp.zeros((N, Lo, C), jnp.float32)
    for j in range(KS):
        acc = acc + jnp.einsum('nld,cd->nlc',
                               emb[:, j:j + Lo, :].astype(jnp.float32),
                               weight[:, j, :].astype(jnp.float32))
    acc = jnp.maximum(acc + bias.astype(jnp.float32)[None, None, :], 0.0)
    return jnp.max(acc, axis=1).astype(emb.dtype)


if __name__ == "__main__":
    vocab, E, L, N, C, n_class = 50, 8, 16, 2, 16, 2
    kernel_sizes = [3, 4, 5]
    keys = jax.random.split(jax.random.PRNGKey(0), 12)

    pretrain = jax.random.normal(keys[0], (vocab, E), dtype=jnp.float32)
    tokens = jax.random.randint(keys[1], (N, L), 0, vocab)
    labels = jax.random.randint(keys[2], (N,), 0, n_class)

    # embd(x) cat constant_embd(x); dropout_embd = identity at inference.
    # TODO(synk): embedding gather / dropout left to XLA (no Pallas win at this size).
    emb = jnp.concatenate([pretrain[tokens], pretrain[tokens]], axis=-1)   # (N, L, 2E)

    pooled = []
    for idx, ks in enumerate(kernel_sizes):
        w = 0.1 * jax.random.normal(keys[3 + 2 * idx], (C, ks, 2 * E), dtype=jnp.float32)
        b = 0.1 * jax.random.normal(keys[4 + 2 * idx], (C,), dtype=jnp.float32)
        y = conv_relu_global_max(emb, w, b)        # fused conv+ReLU+globalmax
        jax.block_until_ready(y)
        ref = _conv_relu_gmax_ref(emb, w, b)
        assert y.shape == (N, C), (y.shape, (N, C))
        assert jnp.allclose(y, ref, atol=1e-3, rtol=1e-3), f"branch ks={ks} mismatch"
        pooled.append(y)

    # Classifier head (tiny) kept in plain JAX, mirroring the torch module.
    # TODO(synk): fc / log_softmax / CrossEntropyLoss left to XLA (negligible work).
    feats = jnp.concatenate(pooled, axis=1)                    # (N, 3*C), dropout=id
    fc_w = 0.1 * jax.random.normal(keys[9], (3 * C, n_class), dtype=jnp.float32)
    fc_b = jnp.zeros((n_class,), jnp.float32)
    outputs = jax.nn.log_softmax(feats @ fc_w + fc_b, axis=-1)     # F.log_softmax
    ce_logp = jax.nn.log_softmax(outputs, axis=-1)                 # CE re-normalizes
    loss = -jnp.mean(jnp.take_along_axis(ce_logp, labels[:, None], axis=1))
    pred = jnp.argmax(outputs, axis=-1)
    jax.block_until_ready((loss, pred))

    # Standalone GlobalMaxPool1d module check (lane-dense packed kernel).
    for shape, dt, k in [((2, 16, 14, 1), jnp.float32, keys[10]),
                         ((3, 5, 16, 1), jnp.float32, keys[11]),
                         ((4, 16, 14, 1), jnp.bfloat16, keys[10])]:
        xk = jax.random.normal(k, shape, dtype=dt)
        yk = global_max_pool1d(xk)
        jax.block_until_ready(yk)
        refk = jnp.max(jnp.squeeze(xk, axis=3), axis=2, keepdims=True)
        assert yk.shape == refk.shape, (yk.shape, refk.shape)
        assert jnp.allclose(yk.astype(jnp.float32), refk.astype(jnp.float32)), \
            f"pool mismatch for shape={shape} dtype={dt}"

    print("KERNEL_OK")
</pallas_src>

<mosaic_0001>
module attributes {stable_mosaic.version = 11 : i64} {
  func.func @_conv_relu_gmax_kernel(%arg0: i32, %arg1: memref<2x16x16xf32, #tpu.memory_space<vmem>>, %arg2: memref<3x16x16xf32, #tpu.memory_space<vmem>>, %arg3: memref<1x16xf32, #tpu.memory_space<vmem>>, %arg4: memref<2x1x16xf32, #tpu.memory_space<vmem>>) attributes {dimension_semantics = [#tpu.dimension_semantics<parallel>], iteration_bounds = array<i64: 1>, scalar_prefetch = 0 : i64, scratch_operands = 0 : i64, tpu.core_type = #tpu.core_type<tc>, window_params = [{transform_indices = @transform_0, window_bounds = array<i64: 2, 16, 16>}, {pipeline_mode = #tpu.pipeline_mode<synchronous>, transform_indices = @transform_1, window_bounds = array<i64: 3, 16, 16>}, {pipeline_mode = #tpu.pipeline_mode<synchronous>, transform_indices = @transform_2, window_bounds = array<i64: 1, 16>}, {transform_indices = @transform_3, window_bounds = array<i64: 2, 1, 16>}]} {
    %c0 = arith.constant 0 : index
    %c0_0 = arith.constant 0 : index
    %0 = vector.load %arg3[%c0, %c0_0] : memref<1x16xf32, #tpu.memory_space<vmem>>, vector<1x16xf32>
    %c0_1 = arith.constant 0 : index
    %c0_2 = arith.constant 0 : index
    %c0_3 = arith.constant 0 : index
    %1 = vector.load %arg1[%c0_1, %c0_2, %c0_3] : memref<2x16x16xf32, #tpu.memory_space<vmem>>, vector<1x16x16xf32>
    %2 = vector.shape_cast %1 : vector<1x16x16xf32> to vector<16x16xf32>
    %cst = arith.constant 0.000000e+00 : f32
    %3 = vector.broadcast %cst : f32 to vector<14x16xf32>
    %4 = vector.extract_strided_slice %2 {offsets = [0, 0], sizes = [14, 16], strides = [1, 1]} : vector<16x16xf32> to vector<14x16xf32>
    %c0_4 = arith.constant 0 : index
    %c0_5 = arith.constant 0 : index
    %c0_6 = arith.constant 0 : index
    %5 = vector.load %arg2[%c0_4, %c0_5, %c0_6] : memref<3x16x16xf32, #tpu.memory_space<vmem>>, vector<1x16x16xf32>
    %6 = vector.shape_cast %5 : vector<1x16x16xf32> to vector<16x16xf32>
    %cst_7 = arith.constant dense<0.000000e+00> : vector<14x16xf32>
    %7 = tpu.matmul %4, %6, %cst_7 {dimension_numbers = #tpu.dot_dimension_numbers<[1], [0], [0], [1], [0, 0, 1, 1], [], []>} : vector<14x16xf32>, vector<16x16xf32>, vector<14x16xf32> -> vector<14x16xf32>
    %8 = arith.addf %3, %7 : vector<14x16xf32>
    %9 = vector.extract_strided_slice %2 {offsets = [1, 0], sizes = [14, 16], strides = [1, 1]} : vector<16x16xf32> to vector<14x16xf32>
    %c1 = arith.constant 1 : index
    %c0_8 = arith.constant 0 : index
    %c0_9 = arith.constant 0 : index
    %10 = vector.load %arg2[%c1, %c0_8, %c0_9] : memref<3x16x16xf32, #tpu.memory_space<vmem>>, vector<1x16x16xf32>
    %11 = vector.shape_cast %10 : vector<1x16x16xf32> to vector<16x16xf32>
    %cst_10 = arith.constant dense<0.000000e+00> : vector<14x16xf32>
    %12 = tpu.matmul %9, %11, %cst_10 {dimension_numbers = #tpu.dot_dimension_numbers<[1], [0], [0], [1], [0, 0, 1, 1], [], []>} : vector<14x16xf32>, vector<16x16xf32>, vector<14x16xf32> -> vector<14x16xf32>
    %13 = arith.addf %8, %12 : vector<14x16xf32>
    %14 = vector.extract_strided_slice %2 {offsets = [2, 0], sizes = [14, 16], strides = [1, 1]} : vector<16x16xf32> to vector<14x16xf32>
    %c2 = arith.constant 2 : index
    %c0_11 = arith.constant 0 : index
    %c0_12 = arith.constant 0 : index
    %15 = vector.load %arg2[%c2, %c0_11, %c0_12] : memref<3x16x16xf32, #tpu.memory_space<vmem>>, vector<1x16x16xf32>
    %16 = vector.shape_cast %15 : vector<1x16x16xf32> to vector<16x16xf32>
    %cst_13 = arith.constant dense<0.000000e+00> : vector<14x16xf32>
    %17 = tpu.matmul %14, %16, %cst_13 {dimension_numbers = #tpu.dot_dimension_numbers<[1], [0], [0], [1], [0, 0, 1, 1], [], []>} : vector<14x16xf32>, vector<16x16xf32>, vector<14x16xf32> -> vector<14x16xf32>
    %18 = arith.addf %13, %17 : vector<14x16xf32>
    %19 = vector.broadcast %0 : vector<1x16xf32> to vector<14x16xf32>
    %20 = arith.addf %18, %19 : vector<14x16xf32>
    %cst_14 = arith.constant 0.000000e+00 : f32
    %21 = vector.broadcast %cst_14 : f32 to vector<14x16xf32>
    %22 = arith.maximumf %20, %21 : vector<14x16xf32>
    %cst_15 = arith.constant dense<0xFF800000> : vector<16xf32>
    %23 = vector.multi_reduction <maximumf>, %22, %cst_15 [0] : vector<14x16xf32> to vector<16xf32>
    %24 = vector.shape_cast %23 : vector<16xf32> to vector<1x16xf32>
    %c0_16 = arith.constant 0 : index
    %c0_17 = arith.constant 0 : index
    %c0_18 = arith.constant 0 : index
    %25 = vector.load %arg4[%c0_16, %c0_17, %c0_18] : memref<2x1x16xf32, #tpu.memory_space<vmem>>, vector<1x1x16xf32>
    %26 = vector.shape_cast %25 : vector<1x1x16xf32> to vector<1x16xf32>
    %27 = vector.shape_cast %24 : vector<1x16xf32> to vector<1x1x16xf32>
    tpu.vector_store %arg4[%c0_16, %c0_17, %c0_18], %27 {strides = array<i32>} : memref<2x1x16xf32, #tpu.memory_space<vmem>>, vector<1x1x16xf32>,
    %c1_19 = arith.constant 1 : index
    %c0_20 = arith.constant 0 : index
    %c0_21 = arith.constant 0 : index
    %28 = vector.load %arg1[%c1_19, %c0_20, %c0_21] : memref<2x16x16xf32, #tpu.memory_space<vmem>>, vector<1x16x16xf32>
    %29 = vector.shape_cast %28 : vector<1x16x16xf32> to vector<16x16xf32>
    %cst_22 = arith.constant 0.000000e+00 : f32
    %30 = vector.broadcast %cst_22 : f32 to vector<14x16xf32>
    %31 = vector.extract_strided_slice %29 {offsets = [0, 0], sizes = [14, 16], strides = [1, 1]} : vector<16x16xf32> to vector<14x16xf32>
    %c0_23 = arith.constant 0 : index
    %c0_24 = arith.constant 0 : index
    %c0_25 = arith.constant 0 : index
    %32 = vector.load %arg2[%c0_23, %c0_24, %c0_25] : memref<3x16x16xf32, #tpu.memory_space<vmem>>, vector<1x16x16xf32>
    %33 = vector.shape_cast %32 : vector<1x16x16xf32> to vector<16x16xf32>
    %cst_26 = arith.constant dense<0.000000e+00> : vector<14x16xf32>
    %34 = tpu.matmul %31, %33, %cst_26 {dimension_numbers = #tpu.dot_dimension_numbers<[1], [0], [0], [1], [0, 0, 1, 1], [], []>} : vector<14x16xf32>, vector<16x16xf32>, vector<14x16xf32> -> vector<14x16xf32>
    %35 = arith.addf %30, %34 : vector<14x16xf32>
    %36 = vector.extract_strided_slice %29 {offsets = [1, 0], sizes = [14, 16], strides = [1, 1]} : vector<16x16xf32> to vector<14x16xf32>
    %c1_27 = arith.constant 1 : index
    %c0_28 = arith.constant 0 : index
    %c0_29 = arith.constant 0 : index
    %37 = vector.load %arg2[%c1_27, %c0_28, %c0_29] : memref<3x16x16xf32, #tpu.memory_space<vmem>>, vector<1x16x16xf32>
    %38 = vector.shape_cast %37 : vector<1x16x16xf32> to vector<16x16xf32>
    %cst_30 = arith.constant dense<0.000000e+00> : vector<14x16xf32>
    %39 = tpu.matmul %36, %38, %cst_30 {dimension_numbers = #tpu.dot_dimension_numbers<[1], [0], [0], [1], [0, 0, 1, 1], [], []>} : vector<14x16xf32>, vector<16x16xf32>, vector<14x16xf32> -> vector<14x16xf32>
    %40 = arith.addf %35, %39 : vector<14x16xf32>
    %41 = vector.extract_strided_slice %29 {offsets = [2, 0], sizes = [14, 16], strides = [1, 1]} : vector<16x16xf32> to vector<14x16xf32>
    %c2_31 = arith.constant 2 : index
    %c0_32 = arith.constant 0 : index
    %c0_33 = arith.constant 0 : index
    %42 = vector.load %arg2[%c2_31, %c0_32, %c0_33] : memref<3x16x16xf32, #tpu.memory_space<vmem>>, vector<1x16x16xf32>
    %43 = vector.shape_cast %42 : vector<1x16x16xf32> to vector<16x16xf32>
    %cst_34 = arith.constant dense<0.000000e+00> : vector<14x16xf32>
    %44 = tpu.matmul %41, %43, %cst_34 {dimension_numbers = #tpu.dot_dimension_numbers<[1], [0], [0], [1], [0, 0, 1, 1], [], []>} : vector<14x16xf32>, vector<16x16xf32>, vector<14x16xf32> -> vector<14x16xf32>
    %45 = arith.addf %40, %44 : vector<14x16xf32>
    %46 = vector.broadcast %0 : vector<1x16xf32> to vector<14x16xf32>
    %47 = arith.addf %45, %46 : vector<14x16xf32>
    %cst_35 = arith.constant 0.000000e+00 : f32
    %48 = vector.broadcast %cst_35 : f32 to vector<14x16xf32>
    %49 = arith.maximumf %47, %48 : vector<14x16xf32>
    %cst_36 = arith.constant dense<0xFF800000> : vector<16xf32>
    %50 = vector.multi_reduction <maximumf>, %49, %cst_36 [0] : vector<14x16xf32> to vector<16xf32>
    %51 = vector.shape_cast %50 : vector<16xf32> to vector<1x16xf32>
    %c1_37 = arith.constant 1 : index
    %c0_38 = arith.constant 0 : index
    %c0_39 = arith.constant 0 : index
    %52 = vector.load %arg4[%c1_37, %c0_38, %c0_39] : memref<2x1x16xf32, #tpu.memory_space<vmem>>, vector<1x1x16xf32>
    %53 = vector.shape_cast %52 : vector<1x1x16xf32> to vector<1x16xf32>
    %54 = vector.shape_cast %51 : vector<1x16xf32> to vector<1x1x16xf32>
    tpu.vector_store %arg4[%c1_37, %c0_38, %c0_39], %54 {strides = array<i32>} : memref<2x1x16xf32, #tpu.memory_space<vmem>>, vector<1x1x16xf32>,
    return
  }
  func.func @transform_0(%arg0: i32) -> (i32, i32, i32) {
    %c0_i32 = arith.constant 0 : i32
    %c0_i32_0 = arith.constant 0 : i32
    %c0_i32_1 = arith.constant 0 : i32
    return %arg0, %c0_i32, %c0_i32_0 : i32, i32, i32
  }
  func.func @transform_1(%arg0: i32) -> (i32, i32, i32) {
    %c0_i32 = arith.constant 0 : i32
    %c0_i32_0 = arith.constant 0 : i32
    %c0_i32_1 = arith.constant 0 : i32
    %c0_i32_2 = arith.constant 0 : i32
    return %c0_i32, %c0_i32_0, %c0_i32_1 : i32, i32, i32
  }
  func.func @transform_2(%arg0: i32) -> (i32, i32) {
    %c0_i32 = arith.constant 0 : i32
    %c0_i32_0 = arith.constant 0 : i32
    %c0_i32_1 = arith.constant 0 : i32
    return %c0_i32, %c0_i32_0 : i32, i32
  }
  func.func @transform_3(%arg0: i32) -> (i32, i32, i32) {
    %c0_i32 = arith.constant 0 : i32
    %c0_i32_0 = arith.constant 0 : i32
    %c0_i32_1 = arith.constant 0 : i32
    return %arg0, %c0_i32, %c0_i32_0 : i32, i32, i32
  }
}

</mosaic_0001>

<llo_original>
// kernel: tpu_custom_call.1
$region0: #{tpu_custom_call.1}
  #allocation0 [shape = 'u32[]', space=smem, size = 0x4, offset = 0x4, fixed_abs, tag = 'smem constant byte address 0x4 - core index']
  #allocation1 [shape = 'u32[144,128]{1,0:T(1,128)}', space=vmem, size = 0x12000, scoped, tag = 'internal scratch']
  %s0 = inlined_call_operand.hbm [shape: f32[2,16,16], index: 0, kind: input, shape index: {}]
  %s1 = inlined_call_operand.hbm [shape: f32[3,16,16], index: 1, kind: input, shape index: {}]
  %s2 = inlined_call_operand.vmem [shape: f32[1,16], index: 2, kind: input, shape index: {}]
  %s3 = inlined_call_operand.hbm [shape: f32[2,1,16], index: 3, kind: output, shape index: {}]
  %s4 = sld [smem:[#allocation0]]
  $region30: #{tpu_custom_call.1} parent=0
    _
  %s6 = ssub.s32 1, %s4
  %s7 = scalar_select 0, %s6, %s4
  $region1: #{tpu_custom_call.1} parent=0
    #allocation2 [shape = 'u8[16384]{0}', space=vmem, size = 0x4000, scoped, tag = 'input window, operand 0, single buffered']
    #allocation3 [shape = 's32[1]{0}', space=sflag, size = 0x4, scoped, tag = 'scoped memory for tpu_custom_call.1']
    #allocation4 [shape = 's32[1]{0}', space=sflag, size = 0x4, scoped, tag = 'scoped memory for tpu_custom_call.1']
    #allocation5 [shape = 'u8[24576]{0}', space=vmem, size = 0x6000, scoped, tag = 'input window, operand 1, single buffered']
    #allocation6 [shape = 's32[1]{0}', space=sflag, size = 0x4, scoped, tag = 'scoped memory for tpu_custom_call.1']
    #allocation7 [shape = 'u8[1024]{0}', space=vmem, size = 0x400, scoped, tag = 'output window, operand 0, single buffered']
    %8 = vsyncpa [#allocation3], 0
    %9 = vsyncpa [#allocation6], 0
    %10 = vsyncpa [#allocation4], 0
    // Predicated region
    $region2: #{tpu_custom_call.1} parent=1 // pred_check
      _
    $region3: #{tpu_custom_call.1} parent=1 // pred_check_branch
      %12 = sbr.rel (0) target = $region5
    $region4: #{tpu_custom_call.1} parent=1 // pred_region
      %s14 = ssub.s32 512, 512
      %15 = vsyncadd [#allocation3], %s14
      %s16 = sshll.u32 [#allocation2], 4
      %s17 = int_to_ptr.vmem [resolvable:$true] %s16
      %22 = dma.hbm_to_vmem [thread:$0]  %s0, 512, %s17, [#allocation3], 128, 128, 8
    $region5: #{tpu_custom_call.1} parent=1 // pred_fallthru
      _
    // Predicated region
    $region6: #{tpu_custom_call.1} parent=1 // pred_check
      _
    $region7: #{tpu_custom_call.1} parent=1 // pred_check_branch
      %24 = sbr.rel (0) target = $region9
    $region8: #{tpu_custom_call.1} parent=1 // pred_region
      %s26 = ssub.s32 768, 768
      %27 = vsyncadd [#allocation6], %s26
      %s28 = sshll.u32 [#allocation5], 4
      %s29 = int_to_ptr.vmem [resolvable:$true] %s28
      %34 = dma.hbm_to_vmem [thread:$0]  %s1, 768, %s29, [#allocation6], 128, 128, 8
    $region9: #{tpu_custom_call.1} parent=1 // pred_fallthru
      _
    // Predicated region
    $region10: #{tpu_custom_call.1} parent=1 // pred_check
      _
    $region11: #{tpu_custom_call.1} parent=1 // pred_check_branch
      %36 = sbr.rel (0) target = $region13
    $region12: #{tpu_custom_call.1} parent=1 // pred_region
      _
    $region13: #{tpu_custom_call.1} parent=1 // pred_fallthru
      _
    // Predicated region
    $region14: #{tpu_custom_call.1} parent=1 // pred_check
      _
    $region15: #{tpu_custom_call.1} parent=1 // pred_check_branch
      %38 = sbr.rel (0) target = $region17
    $region16: #{tpu_custom_call.1} parent=1 // pred_region
      %39 = dma.done [#allocation3], 512
    $region17: #{tpu_custom_call.1} parent=1 // pred_fallthru
      _
    // Predicated region
    $region18: #{tpu_custom_call.1} parent=1 // pred_check
      _
    $region19: #{tpu_custom_call.1} parent=1 // pred_check_branch
      %41 = sbr.rel (0) target = $region21
    $region20: #{tpu_custom_call.1} parent=1 // pred_region
      %42 = dma.done [#allocation6], 768
    $region21: #{tpu_custom_call.1} parent=1 // pred_fallthru
      _
    %v43 = vld [vmem:[%s2] sm:$0x1]
    %v44 = vld [vmem:[#allocation2] sm:$0xff]
    %v45 = vld [vmem:[#allocation2 + $0x8] sm:$0xff]
    %v46 = vld [vmem:[#allocation5] sm:$0xff]
    %v47 = vld [vmem:[#allocation5 + $0x8] sm:$0xff]
    %s48 = scalar_lea.vmem [#allocation5], 16
    %v49 = vld [vmem:[%s48] sm:$0xff]
    %v50 = vld [vmem:[%s48 + $0x8] sm:$0xff]
    %vm53 = vcmask 1046528
    %v54 = vrot.slane %v44, 1
    %v55 = vrot.slane %v45, 1
    %v56 = vsel %vm53, %v54, %v55
    %vm57 = vcmask 130048
    %v58 = vsel %vm57, %v56, 0
    %v60 = vsel %vm57, %v55, 0
    %62 = vmatprep.subr.mxu0 0.0
    %63 = vmatpush1.msra.mxu0 %v49
    %64 = vmatprep.subr.mxu0 0.0
    %65 = vmatpush1.msra.mxu0 %v50
    %66 = vmatprep.subr.mxu0 0.0
    %67 = vmatpush1.msra.mxu0 0.0
    %68 = vmatprep.subr.mxu0 0.0
    %69 = vmatpush1.msra.mxu0 0.0
    %70 = vmatprep.subr.mxu0 0.0
    %71 = vmatpush1.msra.mxu0 0.0
    %72 = vmatprep.subr.mxu0 0.0
    %73 = vmatpush1.msra.mxu0 0.0
    %74 = vmatprep.subr.mxu0 0.0
    %75 = vmatpush1.msra.mxu0 0.0
    %76 = vmatprep.subr.mxu0 0.0
    %77 = vmatpush1.msra.mxu0 0.0
    %78 = vmatprep.subr.mxu0 0.0
    %79 = vmatpush1.msra.mxu0 0.0
    %80 = vmatprep.subr.mxu0 0.0
    %81 = vmatpush1.msra.mxu0 0.0
    %82 = vmatprep.subr.mxu0 0.0
    %83 = vmatpush1.msra.mxu0 0.0
    %84 = vmatprep.subr.mxu0 0.0
    %85 = vmatpush1.msra.mxu0 0.0
    %86 = vmatprep.subr.mxu0 0.0
    %87 = vmatpush1.msra.mxu0 0.0
    %88 = vmatprep.subr.mxu0 0.0
    %89 = vmatpush1.msra.mxu0 0.0
    %90 = vmatprep.subr.mxu0 0.0
    %91 = vmatpush1.msra.mxu0 0.0
    %92 = vmatprep.subr.mxu0 0.0
    %93 = vmatpush1.msra.mxu0 0.0
    %94 = vmatprep.subr.mxu0 0.0
    %95 = vmatpush1.msra.mxu0 0.0
    %96 = vmatprep.subr.mxu0 0.0
    %97 = vmatpush1.msra.mxu0 0.0
    %98 = vmatprep.subr.mxu0 0.0
    %99 = vmatpush1.msra.mxu0 0.0
    %100 = vmatprep.subr.mxu0 0.0
    %101 = vmatpush1.msra.mxu0 0.0
    %102 = vmatprep.subr.mxu0 0.0
    %103 = vmatpush1.msra.mxu0 0.0
    %104 = vmatprep.subr.mxu0 0.0
    %105 = vmatpush1.msra.mxu0 0.0
    %106 = vmatprep.subr.mxu0 0.0
    %107 = vmatpush1.msra.mxu0 0.0
    %108 = vmatprep.subr.mxu0 0.0
    %109 = vmatpush1.msra.mxu0 0.0
    %110 = vmatprep.subr.mxu0 0.0
    %111 = vmatpush1.msra.mxu0 0.0
    %112 = vmatprep.subr.mxu0 0.0
    %113 = vmatpush1.msra.mxu0 0.0
    %114 = vmatprep.subr.mxu0 0.0
    %115 = vmatpush1.msra.mxu0 0.0
    %116 = vmatprep.subr.mxu0 0.0
    %117 = vmatpush1.msra.mxu0 0.0
    %118 = vmatprep.subr.mxu0 0.0
    %119 = vmatpush1.msra.mxu0 0.0
    %120 = vmatprep.subr.mxu0 0.0
    %121 = vmatpush1.msra.mxu0 0.0
    %122 = vmatprep.subr.mxu0 0.0
    %123 = vmatpush1.msra.mxu0 0.0
    %124 = vmatprep.subr.mxu0 0.0
    %125 = vmatpush1.msra.mxu0 0.0
    %126 = vmatprep.mubr.f32.mxu0 0.0
    %127 = vmatmul.mubr.f32.gmra.mrb[0].mxu0 %v58
    %v128 = vpop.f32.mrb[0].mxu0
    %v129 = vadd.f32 0.0, %v128
    %v130 = vpop.f32.mrb[0].mxu0
    %131 = vmatprep.mubr.f32.mxu0 0.0
    %132 = vmatmul.mubr.f32.gmra.mrb[0].mxu0 %v60
    %v133 = vpop.f32.mrb[0].mxu0
    %v134 = vadd.f32 0.0, %v133
    %v135 = vpop.f32.mrb[0].mxu0
    %136 = vdwg.mxu0
    %v137 = vsel %vm57, %v44, 0
    %v139 = vsel %vm57, %v45, 0
    %141 = vmatprep.subr.mxu0 0.0
    %142 = vmatpush1.msra.mxu0 %v46
    %143 = vmatprep.subr.mxu0 0.0
    %144 = vmatpush1.msra.mxu0 %v47
    %145 = vmatprep.subr.mxu0 0.0
    %146 = vmatpush1.msra.mxu0 0.0
    %147 = vmatprep.subr.mxu0 0.0
    %148 = vmatpush1.msra.mxu0 0.0
    %149 = vmatprep.subr.mxu0 0.0
    %150 = vmatpush1.msra.mxu0 0.0
    %151 = vmatprep.subr.mxu0 0.0
    %152 = vmatpush1.msra.mxu0 0.0
    %153 = vmatprep.subr.mxu0 0.0
    %154 = vmatpush1.msra.mxu0 0.0
    %155 = vmatprep.subr.mxu0 0.0
    %156 = vmatpush1.msra.mxu0 0.0
    %157 = vmatprep.subr.mxu0 0.0
    %158 = vmatpush1.msra.mxu0 0.0
    %159 = vmatprep.subr.mxu0 0.0
    %160 = vmatpush1.msra.mxu0 0.0
    %161 = vmatprep.subr.mxu0 0.0
    %162 = vmatpush1.msra.mxu0 0.0
    %163 = vmatprep.subr.mxu0 0.0
    %164 = vmatpush1.msra.mxu0 0.0
    %165 = vmatprep.subr.mxu0 0.0
    %166 = vmatpush1.msra.mxu0 0.0
    %167 = vmatprep.subr.mxu0 0.0
    %168 = vmatpush1.msra.mxu0 0.0
    %169 = vmatprep.subr.mxu0 0.0
    %170 = vmatpush1.msra.mxu0 0.0
    %171 = vmatprep.subr.mxu0 0.0
    %172 = vmatpush1.msra.mxu0 0.0
    %173 = vmatprep.subr.mxu0 0.0
    %174 = vmatpush1.msra.mxu0 0.0
    %175 = vmatprep.subr.mxu0 0.0
    %176 = vmatpush1.msra.mxu0 0.0
    %177 = vmatprep.subr.mxu0 0.0
    %178 = vmatpush1.msra.mxu0 0.0
    %179 = vmatprep.subr.mxu0 0.0
    %180 = vmatpush1.msra.mxu0 0.0
    %181 = vmatprep.subr.mxu0 0.0
    %182 = vmatpush1.msra.mxu0 0.0
    %183 = vmatprep.subr.mxu0 0.0
    %184 = vmatpush1.msra.mxu0 0.0
    %185 = vmatprep.subr.mxu0 0.0
    %186 = vmatpush1.msra.mxu0 0.0
    %187 = vmatprep.subr.mxu0 0.0
    %188 = vmatpush1.msra.mxu0 0.0
    %189 = vmatprep.subr.mxu0 0.0
    %190 = vmatpush1.msra.mxu0 0.0
    %191 = vmatprep.subr.mxu0 0.0
    %192 = vmatpush1.msra.mxu0 0.0
    %193 = vmatprep.subr.mxu0 0.0
    %194 = vmatpush1.msra.mxu0 0.0
    %195 = vmatprep.subr.mxu0 0.0
    %196 = vmatpush1.msra.mxu0 0.0
    %197 = vmatprep.subr.mxu0 0.0
    %198 = vmatpush1.msra.mxu0 0.0
    %199 = vmatprep.subr.mxu0 0.0
    %200 = vmatpush1.msra.mxu0 0.0
    %201 = vmatprep.subr.mxu0 0.0
    %202 = vmatpush1.msra.mxu0 0.0
    %203 = vmatprep.subr.mxu0 0.0
    %204 = vmatpush1.msra.mxu0 0.0
    %205 = vmatprep.mubr.f32.mxu0 0.0
    %206 = vmatmul.mubr.f32.gmra.mrb[0].mxu0 %v137
    %v207 = vpop.f32.mrb[0].mxu0
    %v208 = vadd.f32 %v129, %v207
    %v209 = vpop.f32.mrb[0].mxu0
    %210 = vmatprep.mubr.f32.mxu0 0.0
    %211 = vmatmul.mubr.f32.gmra.mrb[0].mxu0 %v139
    %v212 = vpop.f32.mrb[0].mxu0
    %v213 = vadd.f32 %v134, %v212
    %v214 = vpop.f32.mrb[0].mxu0
    %215 = vdwg.mxu0
    %s216 = scalar_lea.vmem [#allocation5], 32
    %v217 = vld [vmem:[%s216] sm:$0xff]
    %v218 = vld [vmem:[%s216 + $0x8] sm:$0xff]
    %vm219 = vcmask 1045504
    %v220 = vrot.slane %v44, 2
    %v221 = vrot.slane %v45, 2
    %v222 = vsel %vm219, %v220, %v221
    %v223 = vsel %vm57, %v222, 0
    %v225 = vsel %vm57, %v221, 0
    %227 = vmatprep.subr.mxu0 0.0
    %228 = vmatpush1.msra.mxu0 %v217
    %229 = vmatprep.subr.mxu0 0.0
    %230 = vmatpush1.msra.mxu0 %v218
    %231 = vmatprep.subr.mxu0 0.0
    %232 = vmatpush1.msra.mxu0 0.0
    %233 = vmatprep.subr.mxu0 0.0
    %234 = vmatpush1.msra.mxu0 0.0
    %235 = vmatprep.subr.mxu0 0.0
    %236 = vmatpush1.msra.mxu0 0.0
    %237 = vmatprep.subr.mxu0 0.0
    %238 = vmatpush1.msra.mxu0 0.0
    %239 = vmatprep.subr.mxu0 0.0
    %240 = vmatpush1.msra.mxu0 0.0
    %241 = vmatprep.subr.mxu0 0.0
    %242 = vmatpush1.msra.mxu0 0.0
    %243 = vmatprep.subr.mxu0 0.0
    %244 = vmatpush1.msra.mxu0 0.0
    %245 = vmatprep.subr.mxu0 0.0
    %246 = vmatpush1.msra.mxu0 0.0
    %247 = vmatprep.subr.mxu0 0.0
    %248 = vmatpush1.msra.mxu0 0.0
    %249 = vmatprep.subr.mxu0 0.0
    %250 = vmatpush1.msra.mxu0 0.0
    %251 = vmatprep.subr.mxu0 0.0
    %252 = vmatpush1.msra.mxu0 0.0
    %253 = vmatprep.subr.mxu0 0.0
    %254 = vmatpush1.msra.mxu0 0.0
    %255 = vmatprep.subr.mxu0 0.0
    %256 = vmatpush1.msra.mxu0 0.0
    %257 = vmatprep.subr.mxu0 0.0
    %258 = vmatpush1.msra.mxu0 0.0
    %259 = vmatprep.subr.mxu0 0.0
    %260 = vmatpush1.msra.mxu0 0.0
    %261 = vmatprep.subr.mxu0 0.0
    %262 = vmatpush1.msra.mxu0 0.0
    %263 = vmatprep.subr.mxu0 0.0
    %264 = vmatpush1.msra.mxu0 0.0
    %265 = vmatprep.subr.mxu0 0.0
    %266 = vmatpush1.msra.mxu0 0.0
    %267 = vmatprep.subr.mxu0 0.0
    %268 = vmatpush1.msra.mxu0 0.0
    %269 = vmatprep.subr.mxu0 0.0
    %270 = vmatpush1.msra.mxu0 0.0
    %271 = vmatprep.subr.mxu0 0.0
    %272 = vmatpush1.msra.mxu0 0.0
    %273 = vmatprep.subr.mxu0 0.0
    %274 = vmatpush1.msra.mxu0 0.0
    %275 = vmatprep.subr.mxu0 0.0
    %276 = vmatpush1.msra.mxu0 0.0
    %277 = vmatprep.subr.mxu0 0.0
    %278 = vmatpush1.msra.mxu0 0.0
    %279 = vmatprep.subr.mxu0 0.0
    %280 = vmatpush1.msra.mxu0 0.0
    %281 = vmatprep.subr.mxu0 0.0
    %282 = vmatpush1.msra.mxu0 0.0
    %283 = vmatprep.subr.mxu0 0.0
    %284 = vmatpush1.msra.mxu0 0.0
    %285 = vmatprep.subr.mxu0 0.0
    %286 = vmatpush1.msra.mxu0 0.0
    %287 = vmatprep.subr.mxu0 0.0
    %288 = vmatpush1.msra.mxu0 0.0
    %289 = vmatprep.subr.mxu0 0.0
    %290 = vmatpush1.msra.mxu0 0.0
    %291 = vmatprep.mubr.f32.mxu0 0.0
    %292 = vmatmul.mubr.f32.gmra.mrb[0].mxu0 %v223
    %v293 = vpop.f32.mrb[0].mxu0
    %v294 = vadd.f32 0.0, %v293
    %v295 = vpop.f32.mrb[0].mxu0
    %296 = vmatprep.mubr.f32.mxu0 0.0
    %297 = vmatmul.mubr.f32.gmra.mrb[0].mxu0 %v225
    %v298 = vpop.f32.mrb[0].mxu0
    %v299 = vadd.f32 0.0, %v298
    %v300 = vpop.f32.mrb[0].mxu0
    %301 = vdwg.mxu0
    %v302 = vadd.f32 %v208, %v294
    %v303 = vadd.f32 %v213, %v299
    %v305 = vlaneseq
    %v306 = vshrl.u32 %v305, 7
    %v307 = vsub.s32 0, %v306
    %v308 = vrot.slane %v43, %v307
    %v310 = vadd.f32 %v302, %v308
    %v311 = vadd.f32 %v303, %v308
    %v312 = vmax.f32 %v310, 0.0
    %v313 = vmax.f32 %v311, 0.0
    %v314 = vsel %vm57, %v312, -inf
    %vm315 = vcmask 128000
    %v316 = vsel %vm315, %v313, -inf
    %v317 = vmax.f32 %v314, %v316
    %v318 = vrot.slane %v317, 4
    %v319 = vmax.f32 %v317, %v318
    %v320 = vrot.slane %v319, 2
    %v321 = vmax.f32 %v319, %v320
    %v322 = vrot.slane %v321, 1
    %v323 = vmax.f32 %v321, %v322
    %vm324 = vcmask 122880
    %325 = vst.msk [vmem:[#allocation7] sm:$0x1] %vm324, %v323
    %s326 = scalar_lea.vmem [#allocation2], 16
    %v327 = vld [vmem:[%s326] sm:$0xff]
    %v328 = vld [vmem:[%s326 + $0x8] sm:$0xff]
    %v329 = vld [vmem:[#allocation5] sm:$0xff]
    %v330 = vld [vmem:[#allocation5 + $0x8] sm:$0xff]
    %v331 = vld [vmem:[%s48] sm:$0xff]
    %v332 = vld [vmem:[%s48 + $0x8] sm:$0xff]
    %v335 = vrot.slane %v327, 1
    %v336 = vrot.slane %v328, 1
    %v337 = vsel %vm53, %v335, %v336
    %v338 = vsel %vm57, %v337, 0
    %v340 = vsel %vm57, %v336, 0
    %342 = vmatprep.subr.mxu0 0.0
    %343 = vmatpush1.msra.mxu0 %v331
    %344 = vmatprep.subr.mxu0 0.0
    %345 = vmatpush1.msra.mxu0 %v332
    %346 = vmatprep.subr.mxu0 0.0
    %347 = vmatpush1.msra.mxu0 0.0
    %348 = vmatprep.subr.mxu0 0.0
    %349 = vmatpush1.msra.mxu0 0.0
    %350 = vmatprep.subr.mxu0 0.0
    %351 = vmatpush1.msra.mxu0 0.0
    %352 = vmatprep.subr.mxu0 0.0
    %353 = vmatpush1.msra.mxu0 0.0
    %354 = vmatprep.subr.mxu0 0.0
    %355 = vmatpush1.msra.mxu0 0.0
    %356 = vmatprep.subr.mxu0 0.0
    %357 = vmatpush1.msra.mxu0 0.0
    %358 = vmatprep.subr.mxu0 0.0
    %359 = vmatpush1.msra.mxu0 0.0
    %360 = vmatprep.subr.mxu0 0.0
    %361 = vmatpush1.msra.mxu0 0.0
    %362 = vmatprep.subr.mxu0 0.0
    %363 = vmatpush1.msra.mxu0 0.0
    %364 = vmatprep.subr.mxu0 0.0
    %365 = vmatpush1.msra.mxu0 0.0
    %366 = vmatprep.subr.mxu0 0.0
    %367 = vmatpush1.msra.mxu0 0.0
    %368 = vmatprep.subr.mxu0 0.0
    %369 = vmatpush1.msra.mxu0 0.0
    %370 = vmatprep.subr.mxu0 0.0
    %371 = vmatpush1.msra.mxu0 0.0
    %372 = vmatprep.subr.mxu0 0.0
    %373 = vmatpush1.msra.mxu0 0.0
    %374 = vmatprep.subr.mxu0 0.0
    %375 = vmatpush1.msra.mxu0 0.0
    %376 = vmatprep.subr.mxu0 0.0
    %377 = vmatpush1.msra.mxu0 0.0
    %378 = vmatprep.subr.mxu0 0.0
    %379 = vmatpush1.msra.mxu0 0.0
    %380 = vmatprep.subr.mxu0 0.0
    %381 = vmatpush1.msra.mxu0 0.0
    %382 = vmatprep.subr.mxu0 0.0
    %383 = vmatpush1.msra.mxu0 0.0
    %384 = vmatprep.subr.mxu0 0.0
    %385 = vmatpush1.msra.mxu0 0.0
    %386 = vmatprep.subr.mxu0 0.0
    %387 = vmatpush1.msra.mxu0 0.0
    %388 = vmatprep.subr.mxu0 0.0
    %389 = vmatpush1.msra.mxu0 0.0
    %390 = vmatprep.subr.mxu0 0.0
    %391 = vmatpush1.msra.mxu0 0.0
    %392 = vmatprep.subr.mxu0 0.0
    %393 = vmatpush1.msra.mxu0 0.0
    %394 = vmatprep.subr.mxu0 0.0
    %395 = vmatpush1.msra.mxu0 0.0
    %396 = vmatprep.subr.mxu0 0.0
    %397 = vmatpush1.msra.mxu0 0.0
    %398 = vmatprep.subr.mxu0 0.0
    %399 = vmatpush1.msra.mxu0 0.0
    %400 = vmatprep.subr.mxu0 0.0
    %401 = vmatpush1.msra.mxu0 0.0
    %402 = vmatprep.subr.mxu0 0.0
    %403 = vmatpush1.msra.mxu0 0.0
    %404 = vmatprep.subr.mxu0 0.0
    %405 = vmatpush1.msra.mxu0 0.0
    %406 = vmatprep.mubr.f32.mxu0 0.0
    %407 = vmatmul.mubr.f32.gmra.mrb[0].mxu0 %v338
    %v408 = vpop.f32.mrb[0].mxu0
    %v409 = vadd.f32 0.0, %v408
    %v410 = vpop.f32.mrb[0].mxu0
    %411 = vmatprep.mubr.f32.mxu0 0.0
    %412 = vmatmul.mubr.f32.gmra.mrb[0].mxu0 %v340
    %v413 = vpop.f32.mrb[0].mxu0
    %v414 = vadd.f32 0.0, %v413
    %v415 = vpop.f32.mrb[0].mxu0
    %416 = vdwg.mxu0
    %v417 = vsel %vm57, %v327, 0
    %v419 = vsel %vm57, %v328, 0
    %421 = vmatprep.subr.mxu0 0.0
    %422 = vmatpush1.msra.mxu0 %v329
    %423 = vmatprep.subr.mxu0 0.0
    %424 = vmatpush1.msra.mxu0 %v330
    %425 = vmatprep.subr.mxu0 0.0
    %426 = vmatpush1.msra.mxu0 0.0
    %427 = vmatprep.subr.mxu0 0.0
    %428 = vmatpush1.msra.mxu0 0.0
    %429 = vmatprep.subr.mxu0 0.0
    %430 = vmatpush1.msra.mxu0 0.0
    %431 = vmatprep.subr.mxu0 0.0
    %432 = vmatpush1.msra.mxu0 0.0
    %433 = vmatprep.subr.mxu0 0.0
    %434 = vmatpush1.msra.mxu0 0.0
    %435 = vmatprep.subr.mxu0 0.0
    %436 = vmatpush1.msra.mxu0 0.0
    %437 = vmatprep.subr.mxu0 0.0
    %438 = vmatpush1.msra.mxu0 0.0
    %439 = vmatprep.subr.mxu0 0.0
    %440 = vmatpush1.msra.mxu0 0.0
    %441 = vmatprep.subr.mxu0 0.0
    %442 = vmatpush1.msra.mxu0 0.0
    %443 = vmatprep.subr.mxu0 0.0
    %444 = vmatpush1.msra.mxu0 0.0
    %445 = vmatprep.subr.mxu0 0.0
    %446 = vmatpush1.msra.mxu0 0.0
    %447 = vmatprep.subr.mxu0 0.0
    %448 = vmatpush1.msra.mxu0 0.0
    %449 = vmatprep.subr.mxu0 0.0
    %450 = vmatpush1.msra.mxu0 0.0
    %451 = vmatprep.subr.mxu0 0.0
    %452 = vmatpush1.msra.mxu0 0.0
    %453 = vmatprep.subr.mxu0 0.0
    %454 = vmatpush1.msra.mxu0 0.0
    %455 = vmatprep.subr.mxu0 0.0
    %456 = vmatpush1.msra.mxu0 0.0
    %457 = vmatprep.subr.mxu0 0.0
    %458 = vmatpush1.msra.mxu0 0.0
    %459 = vmatprep.subr.mxu0 0.0
    %460 = vmatpush1.msra.mxu0 0.0
    %461 = vmatprep.subr.mxu0 0.0
    %462 = vmatpush1.msra.mxu0 0.0
    %463 = vmatprep.subr.mxu0 0.0
    %464 = vmatpush1.msra.mxu0 0.0
    %465 = vmatprep.subr.mxu0 0.0
    %466 = vmatpush1.msra.mxu0 0.0
    %467 = vmatprep.subr.mxu0 0.0
    %468 = vmatpush1.msra.mxu0 0.0
    %469 = vmatprep.subr.mxu0 0.0
    %470 = vmatpush1.msra.mxu0 0.0
    %471 = vmatprep.subr.mxu0 0.0
    %472 = vmatpush1.msra.mxu0 0.0
    %473 = vmatprep.subr.mxu0 0.0
    %474 = vmatpush1.msra.mxu0 0.0
    %475 = vmatprep.subr.mxu0 0.0
    %476 = vmatpush1.msra.mxu0 0.0
    %477 = vmatprep.subr.mxu0 0.0
    %478 = vmatpush1.msra.mxu0 0.0
    %479 = vmatprep.subr.mxu0 0.0
    %480 = vmatpush1.msra.mxu0 0.0
    %481 = vmatprep.subr.mxu0 0.0
    %482 = vmatpush1.msra.mxu0 0.0
    %483 = vmatprep.subr.mxu0 0.0
    %484 = vmatpush1.msra.mxu0 0.0
    %485 = vmatprep.mubr.f32.mxu0 0.0
    %486 = vmatmul.mubr.f32.gmra.mrb[0].mxu0 %v417
    %v487 = vpop.f32.mrb[0].mxu0
    %v488 = vadd.f32 %v409, %v487
    %v489 = vpop.f32.mrb[0].mxu0
    %490 = vmatprep.mubr.f32.mxu0 0.0
    %491 = vmatmul.mubr.f32.gmra.mrb[0].mxu0 %v419
    %v492 = vpop.f32.mrb[0].mxu0
    %v493 = vadd.f32 %v414, %v492
    %v494 = vpop.f32.mrb[0].mxu0
    %495 = vdwg.mxu0
    %v496 = vld [vmem:[%s216] sm:$0xff]
    %v497 = vld [vmem:[%s216 + $0x8] sm:$0xff]
    %v498 = vrot.slane %v327, 2
    %v499 = vrot.slane %v328, 2
    %v500 = vsel %vm219, %v498, %v499
    %v501 = vsel %vm57, %v500, 0
    %v503 = vsel %vm57, %v499, 0
    %505 = vmatprep.subr.mxu0 0.0
    %506 = vmatpush1.msra.mxu0 %v496
    %507 = vmatprep.subr.mxu0 0.0
    %508 = vmatpush1.msra.mxu0 %v497
    %509 = vmatprep.subr.mxu0 0.0
    %510 = vmatpush1.msra.mxu0 0.0
    %511 = vmatprep.subr.mxu0 0.0
    %512 = vmatpush1.msra.mxu0 0.0
    %513 = vmatprep.subr.mxu0 0.0
    %514 = vmatpush1.msra.mxu0 0.0
    %515 = vmatprep.subr.mxu0 0.0
    %516 = vmatpush1.msra.mxu0 0.0
    %517 = vmatprep.subr.mxu0 0.0
    %518 = vmatpush1.msra.mxu0 0.0
    %519 = vmatprep.subr.mxu0 0.0
    %520 = vmatpush1.msra.mxu0 0.0
    %521 = vmatprep.subr.mxu0 0.0
    %522 = vmatpush1.msra.mxu0 0.0
    %523 = vmatprep.subr.mxu0 0.0
    %524 = vmatpush1.msra.mxu0 0.0
    %525 = vmatprep.subr.mxu0 0.0
    %526 = vmatpush1.msra.mxu0 0.0
    %527 = vmatprep.subr.mxu0 0.0
    %528 = vmatpush1.msra.mxu0 0.0
    %529 = vmatprep.subr.mxu0 0.0
    %530 = vmatpush1.msra.mxu0 0.0
    %531 = vmatprep.subr.mxu0 0.0
    %532 = vmatpush1.msra.mxu0 0.0
    %533 = vmatprep.subr.mxu0 0.0
    %534 = vmatpush1.msra.mxu0 0.0
    %535 = vmatprep.subr.mxu0 0.0
    %536 = vmatpush1.msra.mxu0 0.0
    %537 = vmatprep.subr.mxu0 0.0
    %538 = vmatpush1.msra.mxu0 0.0
    %539 = vmatprep.subr.mxu0 0.0
    %540 = vmatpush1.msra.mxu0 0.0
    %541 = vmatprep.subr.mxu0 0.0
    %542 = vmatpush1.msra.mxu0 0.0
    %543 = vmatprep.subr.mxu0 0.0
    %544 = vmatpush1.msra.mxu0 0.0
    %545 = vmatprep.subr.mxu0 0.0
    %546 = vmatpush1.msra.mxu0 0.0
    %547 = vmatprep.subr.mxu0 0.0
    %548 = vmatpush1.msra.mxu0 0.0
    %549 = vmatprep.subr.mxu0 0.0
    %550 = vmatpush1.msra.mxu0 0.0
    %551 = vmatprep.subr.mxu0 0.0
    %552 = vmatpush1.msra.mxu0 0.0
    %553 = vmatprep.subr.mxu0 0.0
    %554 = vmatpush1.msra.mxu0 0.0
    %555 = vmatprep.subr.mxu0 0.0
    %556 = vmatpush1.msra.mxu0 0.0
    %557 = vmatprep.subr.mxu0 0.0
    %558 = vmatpush1.msra.mxu0 0.0
    %559 = vmatprep.subr.mxu0 0.0
    %560 = vmatpush1.msra.mxu0 0.0
    %561 = vmatprep.subr.mxu0 0.0
    %562 = vmatpush1.msra.mxu0 0.0
    %563 = vmatprep.subr.mxu0 0.0
    %564 = vmatpush1.msra.mxu0 0.0
    %565 = vmatprep.subr.mxu0 0.0
    %566 = vmatpush1.msra.mxu0 0.0
    %567 = vmatprep.subr.mxu0 0.0
    %568 = vmatpush1.msra.mxu0 0.0
    %569 = vmatprep.mubr.f32.mxu0 0.0
    %570 = vmatmul.mubr.f32.gmra.mrb[0].mxu0 %v501
    %v571 = vpop.f32.mrb[0].mxu0
    %v572 = vadd.f32 0.0, %v571
    %v573 = vpop.f32.mrb[0].mxu0
    %574 = vmatprep.mubr.f32.mxu0 0.0
    %575 = vmatmul.mubr.f32.gmra.mrb[0].mxu0 %v503
    %v576 = vpop.f32.mrb[0].mxu0
    %v577 = vadd.f32 0.0, %v576
    %v578 = vpop.f32.mrb[0].mxu0
    %579 = vdwg.mxu0
    %v580 = vadd.f32 %v488, %v572
    %v581 = vadd.f32 %v493, %v577
    %v582 = vadd.f32 %v580, %v308
    %v583 = vadd.f32 %v581, %v308
    %v584 = vmax.f32 %v582, 0.0
    %v585 = vmax.f32 %v583, 0.0
    %v586 = vsel %vm57, %v584, -inf
    %v587 = vsel %vm315, %v585, -inf
    %v588 = vmax.f32 %v586, %v587
    %v589 = vrot.slane %v588, 4
    %v590 = vmax.f32 %v588, %v589
    %v591 = vrot.slane %v590, 2
    %v592 = vmax.f32 %v590, %v591
    %v593 = vrot.slane %v592, 1
    %v594 = vmax.f32 %v592, %v593
    %s595 = scalar_lea.vmem [#allocation7], 1
    %596 = vst.msk [vmem:[%s595] sm:$0x1] %vm324, %v594
    // Predicated region
    $region22: #{tpu_custom_call.1} parent=1 // pred_check
      _
    $region23: #{tpu_custom_call.1} parent=1 // pred_check_branch
      %598 = sbr.rel (0) target = $region25
    $region24: #{tpu_custom_call.1} parent=1 // pred_region
      %s600 = ssub.s32 32, 32
      %601 = vsyncadd [#allocation4], %s600
      %s602 = sshll.u32 [#allocation7], 4
      %s603 = int_to_ptr.vmem [resolvable:$true] %s602
      %608 = dma.vmem_to_hbm [thread:$0]  %s603, 32, %s3, [#allocation4], 16, 16, 1
    $region25: #{tpu_custom_call.1} parent=1 // pred_fallthru
      _
    // Predicated region
    $region26: #{tpu_custom_call.1} parent=1 // pred_check
      _
    $region27: #{tpu_custom_call.1} parent=1 // pred_check_branch
      %610 = sbr.rel (0) target = $region29
    $region28: #{tpu_custom_call.1} parent=1 // pred_region
      %611 = dma.done [#allocation4], 32
    $region29: #{tpu_custom_call.1} parent=1 // pred_fallthru
      _
    %612 = vsyncpa [#allocation3], 1
    %613 = vsyncpa [#allocation6], 1
    %614 = vsyncpa [#allocation4], 1

</llo_original>
